<compile_context>
chip_gen: v5e
topology: v5e:2x2
jax: 0.10.0
libtpu: 0.0.40
codegen_flags: <defaults>
</compile_context>

<pallas_src>
import functools
import numpy as np

import jax
import jax.numpy as jnp
from jax import lax
from jax.experimental import pallas as pl
from jax.experimental.pallas import tpu as pltpu


# ----------------------------------------------------------------------------
# small helpers
# ----------------------------------------------------------------------------
def _round_up(x, m):
    return ((x + m - 1) // m) * m


_VMEM_CAP = None


def _tpu_vmem_capacity():
    """Physical per-core VMEM bytes; conservative (v7x-sized) fallback."""
    global _VMEM_CAP
    if _VMEM_CAP is None:
        try:
            _VMEM_CAP = int(pltpu.get_tpu_info().vmem_capacity_bytes)
        except Exception:
            _VMEM_CAP = 64 * 1024 * 1024
    return _VMEM_CAP


def _default_row_tile():
    # 1024-row tiles where VMEM allows (v5e/v6e: 128 MiB); 512 on v7x (64 MiB).
    return 1024 if _tpu_vmem_capacity() >= 96 * 1024 * 1024 else 512


def _compiler_params(semantics, block_bytes):
    # keep >=25% headroom under physical VMEM; never under-provision tiny tiles
    cap = int(0.75 * _tpu_vmem_capacity())
    vmem = int(min(cap, max(32 * 1024 * 1024, 4 * int(block_bytes))))
    return pltpu.CompilerParams(dimension_semantics=semantics,
                                vmem_limit_bytes=vmem)


def _choose_row_tile(n, max_tile, min_steps=2, max_waste=0.125):
    """Sublane (row) tile: multiple of 8, >=min_steps grid steps when there is
    enough work (v7x megacore), padding waste bounded."""
    n8 = _round_up(max(int(n), 1), 8)
    tm = _round_up(min(int(max_tile), n8), 8)
    if n8 // tm < min_steps and n8 >= 16:
        tm = _round_up(-(-n8 // min_steps), 8)
    while tm > 8:
        n_pad = _round_up(n8, tm)
        if (n_pad - n8) / n_pad <= max_waste:
            break
        tm = _round_up(max(tm // 2, 8), 8)
    return tm, _round_up(n8, tm)


def _choose_lane_tile(m, max_tile, max_waste=0.125):
    """Lane (column) tile: multiple of 128 (lane-dense output), waste bounded."""
    m128 = _round_up(max(int(m), 1), 128)
    tn = _round_up(min(int(max_tile), m128), 128)
    while tn > 128:
        m_pad = _round_up(m128, tn)
        if (m_pad - m128) / m_pad <= max_waste:
            break
        tn = _round_up(max(tn // 2, 128), 128)
    return tn, _round_up(m128, tn)


# ----------------------------------------------------------------------------
# Pallas kernel 1: fused node embedding + per-node edge-score projections
#   h   = relu(x @ W + b)                     (MXU, f32 accumulation)
#   out = h + h @ w12   with w12[:D, D] = w1, w12[:D, D+1] = w2, else 0
# Padded columns of h (>= D) are exactly zero, so out[:, :D] == h,
# out[:, D] == <h, w1>, out[:, D+1] == <h, w2>.  One lane-dense f32 slab
# carries both the embedding and the score projections (no extra writeback).
# ----------------------------------------------------------------------------
def _embed_score_kernel(x_ref, w_ref, b_ref, w12_ref, out_ref):
    h = jnp.dot(x_ref[...], w_ref[...], preferred_element_type=jnp.float32)
    h = jnp.maximum(h + b_ref[...], 0.0)
    uv = jnp.dot(h.astype(w12_ref.dtype), w12_ref[...],
                 preferred_element_type=jnp.float32)
    out_ref[...] = h + uv


@functools.partial(jax.jit, static_argnames=("d_out", "compute_dtype", "max_tile"))
def _embed_scores_impl(x, W_p, b_p, w12_p, *, d_out, compute_dtype, max_tile):
    """Returns (h, u1, u2): h = relu(x@W+b) (N,D) f32; u1 = <h, w1>, u2 = <h, w2>.
    Per-edge contraction score is then sigmoid(u1[src] + u2[dst] + bs)."""
    N, Fin = x.shape
    Fp, Dp = W_p.shape
    tm, Np = _choose_row_tile(N, max_tile)

    x_p = jnp.pad(x.astype(compute_dtype), ((0, Np - N), (0, Fp - Fin)))

    isz = np.dtype(compute_dtype).itemsize
    block_bytes = (tm * Fp * isz + Fp * Dp * isz + Dp * 4 + Dp * Dp * isz
                   + tm * Dp * 4)
    cost = pl.CostEstimate(
        flops=2 * Np * Fp * Dp + 2 * Np * Dp * Dp + 2 * Np * Dp,
        transcendentals=0,
        bytes_accessed=(Np * Fp * isz + Fp * Dp * isz + Dp * 4
                        + Dp * Dp * isz + Np * Dp * 4))

    out = pl.pallas_call(
        _embed_score_kernel,
        out_shape=jax.ShapeDtypeStruct((Np, Dp), jnp.float32),
        grid=(Np // tm,),
        in_specs=[
            pl.BlockSpec((tm, Fp), lambda i: (i, 0)),     # x: row tiles
            pl.BlockSpec((Fp, Dp), lambda i: (0, 0)),     # W: VMEM-resident
            pl.BlockSpec((1, Dp), lambda i: (0, 0)),      # bias
            pl.BlockSpec((Dp, Dp), lambda i: (0, 0)),     # [... w1 w2 ...] slab
        ],
        out_specs=pl.BlockSpec((tm, Dp), lambda i: (i, 0)),
        compiler_params=_compiler_params(("parallel",), block_bytes),
        cost_estimate=cost,
    )(x_p, W_p, b_p, w12_p)

    h = out[:N, :d_out]
    u1 = out[:N, d_out]
    u2 = out[:N, d_out + 1]
    return h, u1, u2


@jax.jit
def _edge_scores(u1, u2, src, dst, bs):
    # valid because the EdgePooling sigmoid scorer is linear in [h_src; h_dst]
    return jax.nn.sigmoid(u1[src] + u2[dst] + bs[0, 0])


# ----------------------------------------------------------------------------
# Pallas kernel 2: matrix_cosine (rec_loss hot path)
# Row normalization is hoisted out of the tile loop (fused jit pre-pass);
# the tiled kernel is a pure MXU matmul with a lane-dense (tm, tn) output.
# ----------------------------------------------------------------------------
def _cosine_matmul_kernel(a_ref, b_ref, o_ref):
    o_ref[...] = lax.dot_general(a_ref[...], b_ref[...],
                                 (((1,), (1,)), ((), ())),
                                 preferred_element_type=jnp.float32)


def _normalize_rows(a, eps):
    a32 = a.astype(jnp.float32)
    inv = lax.rsqrt(jnp.maximum(jnp.sum(a32 * a32, axis=1, keepdims=True),
                                eps * eps))
    return a32 * inv


@functools.partial(jax.jit, static_argnames=("eps", "compute_dtype", "max_tile"))
def _matrix_cosine_impl(a, b, *, eps, compute_dtype, max_tile):
    N, D = a.shape
    M, Db = b.shape
    Dp = _round_up(D, 128)
    tm, Np = _choose_row_tile(N, max_tile)
    tn, Mp = _choose_lane_tile(M, max_tile)

    a_p = jnp.pad(_normalize_rows(a, eps).astype(compute_dtype),
                  ((0, Np - N), (0, Dp - D)))
    b_p = jnp.pad(_normalize_rows(b, eps).astype(compute_dtype),
                  ((0, Mp - M), (0, Dp - Db)))

    isz = np.dtype(compute_dtype).itemsize
    block_bytes = tm * Dp * isz + tn * Dp * isz + tm * tn * 4
    cost = pl.CostEstimate(
        flops=2 * Np * Mp * Dp,
        transcendentals=0,
        bytes_accessed=Np * Dp * isz + Mp * Dp * isz + Np * Mp * 4)

    out = pl.pallas_call(
        _cosine_matmul_kernel,
        out_shape=jax.ShapeDtypeStruct((Np, Mp), jnp.float32),
        grid=(Np // tm, Mp // tn),
        in_specs=[
            pl.BlockSpec((tm, Dp), lambda i, j: (i, 0)),
            pl.BlockSpec((tn, Dp), lambda i, j: (j, 0)),
        ],
        out_specs=pl.BlockSpec((tm, tn), lambda i, j: (i, j)),
        compiler_params=_compiler_params(("parallel", "parallel"), block_bytes),
        cost_estimate=cost,
    )(a_p, b_p)
    return out[:N, :M]


def matrix_cosine(a, b, eps=1e-8, *, compute_dtype=jnp.float32, max_tile=None):
    """Pairwise cosine similarity: a:(N,D), b:(M,D) -> (N,M)."""
    if max_tile is None:
        max_tile = _default_row_tile()
    return _matrix_cosine_impl(a, b, eps=float(eps),
                               compute_dtype=compute_dtype,
                               max_tile=int(max_tile))


# ----------------------------------------------------------------------------
# Glue: merge-graph bookkeeping (pure Python, mirrors the torch module's dicts)
# ----------------------------------------------------------------------------
def update_merge_graph(merge_tree, cluster, t):
    merge_tree[t] = {}
    for old, c in enumerate(cluster):
        merge_tree[t].setdefault(int(c), set()).add(old)


def update_spotlights(spotlights, cluster, t):
    spotlights[t] = {}
    for old, c in enumerate(cluster):
        spotlights[t].setdefault(int(c), set()).update(spotlights[t - 1][old])


# ----------------------------------------------------------------------------
# EdgePooling-style layer: fused embed/score -> greedy contract -> merge (sum)
# ----------------------------------------------------------------------------
def edge_pooling_layer(params, x, edge_index, batch, *, compute_dtype, max_tile):
    N = x.shape[0]
    src = np.asarray(edge_index[0])
    dst = np.asarray(edge_index[1])

    # --- one fused + jitted Pallas call: embedding + score projections ---
    d_out = int(params["W"].shape[1])
    h, u1, u2 = _embed_scores_impl(x, params["W_p"], params["b_p"],
                                   params["w12_p"], d_out=d_out,
                                   compute_dtype=compute_dtype,
                                   max_tile=max_tile)

    # --- per-edge sigmoid score from per-node scalars (E adds + sigmoid) ---
    scores = _edge_scores(u1, u2, jnp.asarray(src, jnp.int32),
                          jnp.asarray(dst, jnp.int32), params["bs"])

    # single device->host sync per layer (needed by the sequential matching)
    scores_np = np.asarray(jax.device_get(scores)).reshape(-1)

    # --- greedy maximal matching on descending edge score (host-side) ---
    # TODO(synk): inherently sequential / data-dependent; kept on the host.
    order = np.argsort(-scores_np, kind="stable")
    cluster = -np.ones(N, dtype=np.int64)
    merged_score = {}
    new_id = 0
    for e in order:
        i, j = int(src[e]), int(dst[e])
        if i != j and cluster[i] == -1 and cluster[j] == -1:
            cluster[i] = new_id
            cluster[j] = new_id
            merged_score[new_id] = float(scores_np[e])
            new_id += 1
    unmatched = np.nonzero(cluster == -1)[0]
    cluster[unmatched] = new_id + np.arange(unmatched.shape[0])
    new_id += int(unmatched.shape[0])

    # --- merge node features: sum within cluster, scale merged pairs by score ---
    cl = jnp.asarray(cluster, dtype=jnp.int32)
    D = h.shape[1]
    x_new = jnp.zeros((new_id, D), jnp.float32).at[cl].add(h)
    scale = np.ones(new_id, dtype=np.float32)
    if merged_score:
        scale[np.fromiter(merged_score.keys(), dtype=np.int64)] = \
            np.fromiter(merged_score.values(), dtype=np.float32)
    x_new = x_new * jnp.asarray(scale)[:, None]

    # --- remap edges, drop self-loops / duplicates (vectorized) ---
    new_src = cluster[src]
    new_dst = cluster[dst]
    keep = new_src != new_dst
    if keep.any():
        e_ind_new = np.unique(np.stack([new_src[keep], new_dst[keep]]), axis=1)
    else:
        e_ind_new = np.zeros((2, 0), dtype=np.int64)

    # --- new batch vector (assumes edges never straddle batch boundaries) ---
    batch_np = np.asarray(batch)
    batch_new = np.zeros(new_id, dtype=np.int64)
    batch_new[cluster] = batch_np

    return {
        "internals": {"edge_scores": scores, "x_embed": h, "x_merged": x_new},
        "new_graph": {
            "x_new": x_new,
            "e_ind_new": e_ind_new,
            "batch_new": jnp.asarray(batch_new, dtype=jnp.int32),
            "unpool_cluster": cluster,
        },
    }


# ----------------------------------------------------------------------------
# MotiFiesta model
# ----------------------------------------------------------------------------
class MotiFiestaPallas:
    def __init__(self, n_features=16, dim=32, steps=5, seed=0,
                 compute_dtype=jnp.bfloat16):
        # bf16 MXU inputs by default (f32 accumulation); pass jnp.float32 for
        # exact numeric checks.
        self.n_features = n_features
        self.hidden_dim = dim
        self.steps = steps
        self.compute_dtype = compute_dtype
        self.max_tile = _default_row_tile()
        self.layers = self._init_params(jax.random.PRNGKey(seed))

    def _init_params(self, key):
        layers = []
        in_dim = self.n_features
        D = self.hidden_dim
        Dp = _round_up(D + 2, 128)           # room for the two score lanes
        for _ in range(self.steps + 1):
            key, k1, k2, k3, k4 = jax.random.split(key, 5)
            W = (jax.random.normal(k1, (in_dim, D), jnp.float32)
                 / np.sqrt(in_dim))
            b = jax.random.normal(k2, (1, D), jnp.float32) * 0.01
            w1 = jax.random.normal(k3, (1, D), jnp.float32) / np.sqrt(D)
            w2 = jax.random.normal(k4, (1, D), jnp.float32) / np.sqrt(D)
            bs = jnp.zeros((1, 1), jnp.float32)

            # pre-padded, compute-dtype weight slabs cached once (static)
            Fp = _round_up(in_dim, 128)
            W_p = jnp.zeros((Fp, Dp), self.compute_dtype).at[:in_dim, :D].set(
                W.astype(self.compute_dtype))
            b_p = jnp.zeros((1, Dp), jnp.float32).at[:, :D].set(b)
            w12_p = jnp.zeros((Dp, Dp), self.compute_dtype)
            w12_p = w12_p.at[:D, D].set(w1.reshape(-1).astype(self.compute_dtype))
            w12_p = w12_p.at[:D, D + 1].set(w2.reshape(-1).astype(self.compute_dtype))

            layers.append(dict(W=W, b=b, w1=w1, w2=w2, bs=bs,
                               W_p=W_p, b_p=b_p, w12_p=w12_p))
            in_dim = D
        return layers

    def forward(self, x, edge_index, batch):
        nodes = list(range(x.shape[0]))
        merge_tree = {0: {n: set() for n in nodes}}
        spotlights = {0: {n: {n} for n in nodes}}

        xx, ee, pp, batches, internals = [], [], [], [], []
        for t, params in enumerate(self.layers):
            if edge_index.shape[1] < 1:
                break
            out = edge_pooling_layer(params, x, edge_index, batch,
                                     compute_dtype=self.compute_dtype,
                                     max_tile=self.max_tile)
            ee.append(edge_index)
            xx.append(x)
            pp.append(out["internals"]["edge_scores"].reshape(-1))
            batches.append(batch)
            internals.append(out["internals"])
            update_merge_graph(merge_tree, out["new_graph"]["unpool_cluster"], t + 1)
            update_spotlights(spotlights, out["new_graph"]["unpool_cluster"], t + 1)
            edge_index = out["new_graph"]["e_ind_new"]
            x = out["new_graph"]["x_new"]
            batch = out["new_graph"]["batch_new"]

        merge_info = {"tree": merge_tree, "spotlights": spotlights}
        return xx, pp, ee, batches, merge_info, internals


# ----------------------------------------------------------------------------
# main
# ----------------------------------------------------------------------------
if __name__ == "__main__":
    key = jax.random.PRNGKey(0)
    N, F, DIM, STEPS = 16, 16, 32, 5

    # deterministic node features
    x = jax.random.normal(key, (N, F), dtype=jnp.float32)

    # deterministic small graph: bidirectional ring + a few chords
    edges = []
    for i in range(N):
        edges.append((i, (i + 1) % N))
        edges.append(((i + 1) % N, i))
    for i in range(0, N, 2):
        edges.append((i, (i + 5) % N))
        edges.append(((i + 5) % N, i))
    edge_index = np.array(edges, dtype=np.int64).T          # (2, 48)
    batch = jnp.zeros((N,), dtype=jnp.int32)

    # f32 model for numeric checks
    model = MotiFiestaPallas(n_features=F, dim=DIM, steps=STEPS, seed=0,
                             compute_dtype=jnp.float32)
    xx, pp, ee, batches, merge_info, internals = model.forward(x, edge_index, batch)

    # --- check layer-0 embedding vs plain JAX ---
    p0 = model.layers[0]
    h_ref = jnp.maximum(x @ p0["W"] + p0["b"], 0.0)
    assert np.allclose(np.asarray(internals[0]["x_embed"]), np.asarray(h_ref),
                       atol=5e-2), "embedding mismatch"

    # --- check layer-0 edge scores (fused decomposition) vs plain JAX ---
    src0 = np.asarray(ee[0][0])
    dst0 = np.asarray(ee[0][1])
    s_ref = jax.nn.sigmoid(h_ref[src0] @ p0["w1"].reshape(-1)
                           + h_ref[dst0] @ p0["w2"].reshape(-1)
                           + p0["bs"][0, 0])
    assert np.allclose(np.asarray(pp[0]), np.asarray(s_ref), atol=5e-2), \
        "edge-score mismatch"

    # --- matrix_cosine (rec_loss hot path) vs plain JAX ---
    xm = internals[0]["x_merged"]
    K_pallas = matrix_cosine(xm, xm)
    jax.block_until_ready(K_pallas)
    eps = 1e-8
    nrm = jnp.sqrt(jnp.sum(xm * xm, axis=1, keepdims=True))
    xn = xm / jnp.maximum(nrm, eps)
    K_ref = xn @ xn.T
    assert np.allclose(np.asarray(K_pallas), np.asarray(K_ref), atol=5e-2), \
        "cosine mismatch"

    # --- bf16 fast path (default, recommended on v5e/v6e/v7x): smoke + loose check
    model_bf = MotiFiestaPallas(n_features=F, dim=DIM, steps=STEPS, seed=0,
                                compute_dtype=jnp.bfloat16)
    xx_b, pp_b, ee_b, batches_b, merge_info_b, internals_b = \
        model_bf.forward(x, edge_index, batch)
    jax.block_until_ready(internals_b[0]["x_embed"])
    assert np.allclose(np.asarray(internals_b[0]["x_embed"]), np.asarray(h_ref),
                       atol=2.5e-1), "bf16 embedding mismatch"

    for out in (pp + [v["x_merged"] for v in internals]
                + pp_b + [v["x_merged"] for v in internals_b]):
        jax.block_until_ready(out)

    print("KERNEL_OK")
</pallas_src>

<mosaic_0001>
module attributes {stable_mosaic.version = 11 : i64} {
  func.func @_embed_score_kernel(%arg0: i32, %arg1: memref<8x128xf32, #tpu.memory_space<vmem>>, %arg2: memref<128x128xf32, #tpu.memory_space<vmem>>, %arg3: memref<1x128xf32, #tpu.memory_space<vmem>>, %arg4: memref<128x128xf32, #tpu.memory_space<vmem>>, %arg5: memref<8x128xf32, #tpu.memory_space<vmem>>) attributes {dimension_semantics = [#tpu.dimension_semantics<parallel>], iteration_bounds = array<i64: 2>, scalar_prefetch = 0 : i64, scratch_operands = 0 : i64, tpu.core_type = #tpu.core_type<tc>, window_params = [{transform_indices = @transform_0, window_bounds = array<i64: 8, 128>}, {pipeline_mode = #tpu.pipeline_mode<synchronous>, transform_indices = @transform_1, window_bounds = array<i64: 128, 128>}, {pipeline_mode = #tpu.pipeline_mode<synchronous>, transform_indices = @transform_2, window_bounds = array<i64: 1, 128>}, {pipeline_mode = #tpu.pipeline_mode<synchronous>, transform_indices = @transform_3, window_bounds = array<i64: 128, 128>}, {transform_indices = @transform_4, window_bounds = array<i64: 8, 128>}]} {
    %c0 = arith.constant 0 : index
    %c0_0 = arith.constant 0 : index
    %0 = vector.load %arg1[%c0, %c0_0] : memref<8x128xf32, #tpu.memory_space<vmem>>, vector<8x128xf32>
    %c0_1 = arith.constant 0 : index
    %c0_2 = arith.constant 0 : index
    %1 = vector.load %arg2[%c0_1, %c0_2] : memref<128x128xf32, #tpu.memory_space<vmem>>, vector<128x128xf32>
    %cst = arith.constant dense<0.000000e+00> : vector<8x128xf32>
    %2 = tpu.matmul %0, %1, %cst {dimension_numbers = #tpu.dot_dimension_numbers<[1], [0], [0], [1], [0, 0, 1, 1], [], []>} : vector<8x128xf32>, vector<128x128xf32>, vector<8x128xf32> -> vector<8x128xf32>
    %c0_3 = arith.constant 0 : index
    %c0_4 = arith.constant 0 : index
    %3 = vector.load %arg3[%c0_3, %c0_4] : memref<1x128xf32, #tpu.memory_space<vmem>>, vector<1x128xf32>
    %4 = vector.broadcast %3 : vector<1x128xf32> to vector<8x128xf32>
    %5 = arith.addf %2, %4 : vector<8x128xf32>
    %cst_5 = arith.constant 0.000000e+00 : f32
    %6 = vector.broadcast %cst_5 : f32 to vector<8x128xf32>
    %7 = arith.maximumf %5, %6 : vector<8x128xf32>
    %c0_6 = arith.constant 0 : index
    %c0_7 = arith.constant 0 : index
    %8 = vector.load %arg4[%c0_6, %c0_7] : memref<128x128xf32, #tpu.memory_space<vmem>>, vector<128x128xf32>
    %cst_8 = arith.constant dense<0.000000e+00> : vector<8x128xf32>
    %9 = tpu.matmul %7, %8, %cst_8 {dimension_numbers = #tpu.dot_dimension_numbers<[1], [0], [0], [1], [0, 0, 1, 1], [], []>} : vector<8x128xf32>, vector<128x128xf32>, vector<8x128xf32> -> vector<8x128xf32>
    %10 = arith.addf %7, %9 : vector<8x128xf32>
    %c0_9 = arith.constant 0 : index
    %c0_10 = arith.constant 0 : index
    %11 = vector.load %arg5[%c0_9, %c0_10] : memref<8x128xf32, #tpu.memory_space<vmem>>, vector<8x128xf32>
    tpu.vector_store %arg5[%c0_9, %c0_10], %10 {strides = array<i32>} : memref<8x128xf32, #tpu.memory_space<vmem>>, vector<8x128xf32>,
    return
  }
  func.func @transform_0(%arg0: i32) -> (i32, i32) {
    %c0_i32 = arith.constant 0 : i32
    %c0_i32_0 = arith.constant 0 : i32
    return %arg0, %c0_i32 : i32, i32
  }
  func.func @transform_1(%arg0: i32) -> (i32, i32) {
    %c0_i32 = arith.constant 0 : i32
    %c0_i32_0 = arith.constant 0 : i32
    %c0_i32_1 = arith.constant 0 : i32
    return %c0_i32, %c0_i32_0 : i32, i32
  }
  func.func @transform_2(%arg0: i32) -> (i32, i32) {
    %c0_i32 = arith.constant 0 : i32
    %c0_i32_0 = arith.constant 0 : i32
    %c0_i32_1 = arith.constant 0 : i32
    return %c0_i32, %c0_i32_0 : i32, i32
  }
  func.func @transform_3(%arg0: i32) -> (i32, i32) {
    %c0_i32 = arith.constant 0 : i32
    %c0_i32_0 = arith.constant 0 : i32
    %c0_i32_1 = arith.constant 0 : i32
    return %c0_i32, %c0_i32_0 : i32, i32
  }
  func.func @transform_4(%arg0: i32) -> (i32, i32) {
    %c0_i32 = arith.constant 0 : i32
    %c0_i32_0 = arith.constant 0 : i32
    return %arg0, %c0_i32 : i32, i32
  }
}

</mosaic_0001>

<llo_original>
// kernel: _embed_scores_impl.1
$region0: #{_embed_scores_impl.1}
  #allocation0 [shape = 'u32[]', space=smem, size = 0x4, offset = 0x4, fixed_abs, tag = 'smem constant byte address 0x4 - core index']
  #allocation1 [shape = 'u32[72,128]{1,0:T(1,128)}', space=vmem, size = 0x9000, scoped, tag = 'internal scratch']
  %s0 = inlined_call_operand.vmem [shape: f32[16,128], index: 0, kind: input, shape index: {}]
  %s1 = inlined_call_operand.hbm [shape: f32[128,128], index: 1, kind: input, shape index: {}]
  %s2 = inlined_call_operand.vmem [shape: f32[1,128], index: 2, kind: input, shape index: {}]
  %s3 = inlined_call_operand.hbm [shape: f32[128,128], index: 3, kind: input, shape index: {}]
  %s4 = inlined_call_operand.vmem [shape: f32[16,128], index: 4, kind: output, shape index: {}]
  %s5 = sld [smem:[#allocation0]]
  $region57: #{_embed_scores_impl.1} parent=0
    _
  %s7 = ssub.s32 1, %s5
  %s8 = scalar_select 0, %s7, %s5
  $region1: #{_embed_scores_impl.1} parent=0
    #allocation2 [shape = 'u8[65536]{0}', space=vmem, size = 0x10000, scoped, tag = 'input window, operand 1, single buffered']
    #allocation3 [shape = 's32[2]{0}', space=sflag, size = 0x8, scoped, tag = 'scoped memory for _embed_scores_impl.1']
    #allocation4 [shape = 'u8[65536]{0}', space=vmem, size = 0x10000, scoped, tag = 'input window, operand 3, single buffered']
    #allocation5 [shape = 's32[1]{0}', space=sflag, size = 0x4, scoped, tag = 'scoped memory for _embed_scores_impl.1']
    %9 = vsyncpa [#allocation3], 0
    %10 = vsyncpa [#allocation5], 0
    loop: start=0, step=1, limit=4
    $region2: #{_embed_scores_impl.1} parent=1 // loop_pre_header
      _
    $region3: #{_embed_scores_impl.1} parent=1 // loop_header
      %s12 = sphi 0, %s16
      %p13 = scmp.ge.s32.totalorder %s12, 4
      %s22 = sphi 0, %s24
      %s25 = sphi 0, %s22
      %s26 = sphi 0, %s25
      %s42 = sphi 0, %s26
      %s46 = sphi 0, %s46
      %s48 = sphi 0, %s46
      %s49 = sphi 0, %s48
      %s63 = sphi 0, %s49
      %s67 = sphi 0, %s67
      %s69 = sphi 0, %s67
      %s70 = sphi 0, %s69
      %s84 = sphi 0, %s70
      %s88 = sphi 0, %s88
      %s90 = sphi 0, %s88
      %s91 = sphi 0, %s90
      %s105 = sphi 0, %s91
      %s111 = sphi 0, %s113
      %s114 = sphi 0, %s111
      %s115 = sphi 0, %s114
      %s131 = sphi 0, %s115
    $region4: #{_embed_scores_impl.1} parent=1 // loop_header_branch
      %15 = sbr.rel (%p13) target = $region8
    $region5: #{_embed_scores_impl.1} parent=1 // loop_body
      %s17 = ssub.s32 %s12, 1
      %s18 = ssub.s32 %s12, 2
      %s19 = sadd.s32 %s12, 1
      %s20 = ssub.s32 %s12, %s19
      %p21 = scmp.eq.s32.totalorder %s20, 0
      %s23 = sadd.s32 %s22, 1
      %s24 = scalar_select %p21, %s22, %s23
      %p27 = pneg %p21
      %p28 = scmp.eq.s32.totalorder %s12, 1
      %p29 = por %p27, %p28
      %p30 = scmp.ne.s32.totalorder %s22, %s25
      %p31 = scmp.eq.s32.totalorder %s12, 0
      %p32 = por %p30, %p31
      %p33 = scmp.ne.s32.totalorder %s22, %s25
      %p34 = scmp.eq.s32.totalorder %s17, 1
      %p35 = por %p33, %p34
      %p36 = scmp.ne.s32.totalorder %s25, %s26
      %p37 = scmp.eq.s32.totalorder %s17, 0
      %p38 = por %p36, %p37
      %p39 = scmp.ne.s32.totalorder %s25, %s26
      %p40 = scmp.eq.s32.totalorder %s18, 1
      %p41 = por %p39, %p40
      %p43 = scmp.ne.s32.totalorder %s26, %s42
      %p44 = scmp.eq.s32.totalorder %s18, 0
      %p45 = por %p43, %p44
      %s47 = sadd.s32 %s46, 1
      %p50 = scmp.eq.s32.totalorder %s12, 1
      %p51 = scmp.ne.s32.totalorder %s46, %s48
      %p52 = scmp.eq.s32.totalorder %s12, 0
      %p53 = por %p51, %p52
      %p54 = scmp.ne.s32.totalorder %s46, %s48
      %p55 = scmp.eq.s32.totalorder %s17, 1
      %p56 = por %p54, %p55
      %p57 = scmp.ne.s32.totalorder %s48, %s49
      %p58 = scmp.eq.s32.totalorder %s17, 0
      %p59 = por %p57, %p58
      %p60 = scmp.ne.s32.totalorder %s48, %s49
      %p61 = scmp.eq.s32.totalorder %s18, 1
      %p62 = por %p60, %p61
      %p64 = scmp.ne.s32.totalorder %s49, %s63
      %p65 = scmp.eq.s32.totalorder %s18, 0
      %p66 = por %p64, %p65
      %s68 = sadd.s32 %s67, 1
      %p71 = scmp.eq.s32.totalorder %s12, 1
      %p72 = scmp.ne.s32.totalorder %s67, %s69
      %p73 = scmp.eq.s32.totalorder %s12, 0
      %p74 = por %p72, %p73
      %p75 = scmp.ne.s32.totalorder %s67, %s69
      %p76 = scmp.eq.s32.totalorder %s17, 1
      %p77 = por %p75, %p76
      %p78 = scmp.ne.s32.totalorder %s69, %s70
      %p79 = scmp.eq.s32.totalorder %s17, 0
      %p80 = por %p78, %p79
      %p81 = scmp.ne.s32.totalorder %s69, %s70
      %p82 = scmp.eq.s32.totalorder %s18, 1
      %p83 = por %p81, %p82
      %p85 = scmp.ne.s32.totalorder %s70, %s84
      %p86 = scmp.eq.s32.totalorder %s18, 0
      %p87 = por %p85, %p86
      %s89 = sadd.s32 %s88, 1
      %p92 = scmp.eq.s32.totalorder %s12, 1
      %p93 = scmp.ne.s32.totalorder %s88, %s90
      %p94 = scmp.eq.s32.totalorder %s12, 0
      %p95 = por %p93, %p94
      %p96 = scmp.ne.s32.totalorder %s88, %s90
      %p97 = scmp.eq.s32.totalorder %s17, 1
      %p98 = por %p96, %p97
      %p99 = scmp.ne.s32.totalorder %s90, %s91
      %p100 = scmp.eq.s32.totalorder %s17, 0
      %p101 = por %p99, %p100
      %p102 = scmp.ne.s32.totalorder %s90, %s91
      %p103 = scmp.eq.s32.totalorder %s18, 1
      %p104 = por %p102, %p103
      %p106 = scmp.ne.s32.totalorder %s91, %s105
      %p107 = scmp.eq.s32.totalorder %s18, 0
      %p108 = por %p106, %p107
      %s109 = ssub.s32 %s12, %s19
      %p110 = scmp.eq.s32.totalorder %s109, 0
      %s112 = sadd.s32 %s111, 1
      %s113 = scalar_select %p110, %s111, %s112
      %p116 = pneg %p110
      %p117 = scmp.eq.s32.totalorder %s12, 1
      %p118 = por %p116, %p117
      %p119 = scmp.ne.s32.totalorder %s111, %s114
      %p120 = scmp.eq.s32.totalorder %s12, 0
      %p121 = por %p119, %p120
      %p122 = scmp.ne.s32.totalorder %s111, %s114
      %p123 = scmp.eq.s32.totalorder %s17, 1
      %p124 = por %p122, %p123
      %p125 = scmp.ne.s32.totalorder %s114, %s115
      %p126 = scmp.eq.s32.totalorder %s17, 0
      %p127 = por %p125, %p126
      %p128 = scmp.ne.s32.totalorder %s114, %s115
      %p129 = scmp.eq.s32.totalorder %s18, 1
      %p130 = por %p128, %p129
      %p132 = scmp.ne.s32.totalorder %s115, %s131
      %p133 = scmp.eq.s32.totalorder %s18, 0
      %p134 = por %p132, %p133
      %p135 = scmp.le.s32.totalorder 1, %s12
      %p136 = scmp.lt.s32.totalorder %s12, 3
      %p137 = pnand %p135, %p136
      %p138 = pneg %p137
      // Predicated region
      $region9: #{_embed_scores_impl.1} parent=5 // pred_check
        _
      $region10: #{_embed_scores_impl.1} parent=5 // pred_check_branch
        %140 = sbr.rel (%p137) target = $region12
      $region11: #{_embed_scores_impl.1} parent=5 // pred_region
        %s141 = ssub.s32 %s12, 1
        // Predicated region
        $region13: #{_embed_scores_impl.1} parent=11 // pred_check
          %p142 = pneg %p59
        $region14: #{_embed_scores_impl.1} parent=11 // pred_check_branch
          %144 = sbr.rel (%p142) target = $region16
        $region15: #{_embed_scores_impl.1} parent=11 // pred_region
          %146 = vsyncadd [#allocation3], 0
          %s147 = sshll.u32 %s1, 4
          %s148 = int_to_ptr.hbm [resolvable:$true] %s147
          %s149 = sshll.u32 [#allocation2], 4
          %s150 = int_to_ptr.vmem [resolvable:$true] %s149
          %155 = dma.hbm_to_vmem [thread:$0]  %s148, 2048, %s150, [#allocation3], 128, 128, 8
        $region16: #{_embed_scores_impl.1} parent=11 // pred_fallthru
          _
        // Predicated region
        $region17: #{_embed_scores_impl.1} parent=11 // pred_check
          %p156 = pneg %p80
        $region18: #{_embed_scores_impl.1} parent=11 // pred_check_branch
          %158 = sbr.rel (%p156) target = $region20
        $region19: #{_embed_scores_impl.1} parent=11 // pred_region
          _
        $region20: #{_embed_scores_impl.1} parent=11 // pred_fallthru
          _
        // Predicated region
        $region21: #{_embed_scores_impl.1} parent=11 // pred_check
          %p159 = pneg %p101
        $region22: #{_embed_scores_impl.1} parent=11 // pred_check_branch
          %161 = sbr.rel (%p159) target = $region24
        $region23: #{_embed_scores_impl.1} parent=11 // pred_region
          %163 = vsyncadd [#allocation5], 0
          %s164 = sshll.u32 %s3, 4
          %s165 = int_to_ptr.hbm [resolvable:$true] %s164
          %s166 = sshll.u32 [#allocation4], 4
          %s167 = int_to_ptr.vmem [resolvable:$true] %s166
          %172 = dma.hbm_to_vmem [thread:$0]  %s165, 2048, %s167, [#allocation5], 128, 128, 8
        $region24: #{_embed_scores_impl.1} parent=11 // pred_fallthru
          _
      $region12: #{_embed_scores_impl.1} parent=5 // pred_fallthru
        _
      %p173 = scmp.lt.s32.totalorder %s12, 2
      // Predicated region
      $region25: #{_embed_scores_impl.1} parent=5 // pred_check
        %p174 = pneg %p173
      $region26: #{_embed_scores_impl.1} parent=5 // pred_check_branch
        %176 = sbr.rel (%p174) target = $region28
      $region27: #{_embed_scores_impl.1} parent=5 // pred_region
        // Predicated region
        $region29: #{_embed_scores_impl.1} parent=27 // pred_check
          %p177 = pneg %p32
        $region30: #{_embed_scores_impl.1} parent=27 // pred_check_branch
          %179 = sbr.rel (%p177) target = $region32
        $region31: #{_embed_scores_impl.1} parent=27 // pred_region
          %p180 = scmp.lt.s32.totalorder %s12, 1
          %s181 = scalar_select %p180, %s12, 1
          %s182 = smul.addr %s181, 8
          %s183 = scalar_lea.vmem %s0, %s182
        $region32: #{_embed_scores_impl.1} parent=27 // pred_fallthru
          _
      $region28: #{_embed_scores_impl.1} parent=5 // pred_fallthru
        _
      %p184 = scmp.le.s32.totalorder 1, %s12
      %p185 = scmp.lt.s32.totalorder %s12, 3
      %p186 = pnand %p184, %p185
      %p187 = pneg %p186
      // Predicated region
      $region33: #{_embed_scores_impl.1} parent=5 // pred_check
        _
      $region34: #{_embed_scores_impl.1} parent=5 // pred_check_branch
        %189 = sbr.rel (%p186) target = $region36
      $region35: #{_embed_scores_impl.1} parent=5 // pred_region
        %s190 = ssub.s32 %s12, 1
        // Predicated region
        $region37: #{_embed_scores_impl.1} parent=35 // pred_check
          %p191 = pneg %p59
        $region38: #{_embed_scores_impl.1} parent=35 // pred_check_branch
          %193 = sbr.rel (%p191) target = $region40
        $region39: #{_embed_scores_impl.1} parent=35 // pred_region
          %195 = dma.done [#allocation3], 2048
        $region40: #{_embed_scores_impl.1} parent=35 // pred_fallthru
          _
        // Predicated region
        $region41: #{_embed_scores_impl.1} parent=35 // pred_check
          %p196 = pneg %p101
        $region42: #{_embed_scores_impl.1} parent=35 // pred_check_branch
          %198 = sbr.rel (%p196) target = $region44
        $region43: #{_embed_scores_impl.1} parent=35 // pred_region
          %200 = dma.done [#allocation5], 2048
        $region44: #{_embed_scores_impl.1} parent=35 // pred_fallthru
          _
        %p201 = scmp.lt.s32.totalorder %s17, 1
        %s202 = scalar_select %p201, %s17, 1
        %s203 = smul.addr %s202, 8
        %s204 = scalar_lea.vmem %s0, %s203
        %p205 = pneg %p38
        %p206 = pneg %p35
        %p207 = pneg %p59
        %p208 = pneg %p56
        %p209 = pneg %p80
        %p210 = pneg %p77
        %p211 = pneg %p101
        %p212 = pneg %p98
        %p213 = pneg %p127
        %p214 = pneg %p124
        %p215 = scmp.lt.s32.totalorder %s17, 1
        %s216 = scalar_select %p215, %s17, 1
        %s217 = smul.addr %s216, 8
        %s218 = scalar_lea.vmem %s4, %s217
        %p219 = scmp.lt.s32.totalorder %s17, 1
        %s220 = scalar_select %p219, %s17, 1
        %s221 = smul.addr %s220, 8
        %s222 = scalar_lea.vmem %s0, %s221
        %p223 = scmp.lt.s32.totalorder %s17, 1
        %s224 = scalar_select %p223, %s17, 1
        %s225 = smul.addr %s224, 8
        %s226 = scalar_lea.vmem %s4, %s225
        %v227 = vld [vmem:[%s222] sm:$0xff]
        %v228 = vld [vmem:[#allocation2] sm:$0xff]
        %v229 = vld [vmem:[#allocation2 + $0x8] sm:$0xff]
        %v230 = vld [vmem:[#allocation2 + $0x10] sm:$0xff]
        %v231 = vld [vmem:[#allocation2 + $0x18] sm:$0xff]
        %v232 = vld [vmem:[#allocation2 + $0x20] sm:$0xff]
        %v233 = vld [vmem:[#allocation2 + $0x28] sm:$0xff]
        %v234 = vld [vmem:[#allocation2 + $0x30] sm:$0xff]
        %v235 = vld [vmem:[#allocation2 + $0x38] sm:$0xff]
        %v236 = vld [vmem:[#allocation2 + $0x40] sm:$0xff]
        %v237 = vld [vmem:[#allocation2 + $0x48] sm:$0xff]
        %v238 = vld [vmem:[#allocation2 + $0x50] sm:$0xff]
        %v239 = vld [vmem:[#allocation2 + $0x58] sm:$0xff]
        %v240 = vld [vmem:[#allocation2 + $0x60] sm:$0xff]
        %v241 = vld [vmem:[#allocation2 + $0x68] sm:$0xff]
        %v242 = vld [vmem:[#allocation2 + $0x70] sm:$0xff]
        %v243 = vld [vmem:[#allocation2 + $0x78] sm:$0xff]
        %v244 = vld [vmem:[%s2] sm:$0x1]
        %v246 = vperm.slane %v244, 0
        %248 = vmatpush.msra.mxu0 %v243
        %249 = vmatpush.msra.mxu0 %v242
        %250 = vmatpush.msra.mxu0 %v241
        %251 = vmatpush.msra.mxu0 %v240
        %252 = vmatpush.msra.mxu0 %v239
        %253 = vmatpush.msra.mxu0 %v238
        %254 = vmatpush.msra.mxu0 %v237
        %255 = vmatpush.msra.mxu0 %v236
        %256 = vmatpush.msra.mxu0 %v235
        %257 = vmatpush.msra.mxu0 %v234
        %258 = vmatpush.msra.mxu0 %v233
        %259 = vmatpush.msra.mxu0 %v232
        %260 = vmatpush.msra.mxu0 %v231
        %261 = vmatpush.msra.mxu0 %v230
        %262 = vmatpush.msra.mxu0 %v229
        %263 = vmatpush.msra.mxu0 %v228
        %264 = vmatmul.f32.gmra.mxu0 %v227
        %v265 = vpop.f32.mrf.mxu0
        %v266 = vadd.f32 %v246, %v265
        %267 = vdwg.mxu0
        %v268 = vmax.f32 %v266, 0.0
        %v269 = vld [vmem:[#allocation4] sm:$0xff]
        %v270 = vld [vmem:[#allocation4 + $0x8] sm:$0xff]
        %v271 = vld [vmem:[#allocation4 + $0x10] sm:$0xff]
        %v272 = vld [vmem:[#allocation4 + $0x18] sm:$0xff]
        %v273 = vld [vmem:[#allocation4 + $0x20] sm:$0xff]
        %v274 = vld [vmem:[#allocation4 + $0x28] sm:$0xff]
        %v275 = vld [vmem:[#allocation4 + $0x30] sm:$0xff]
        %v276 = vld [vmem:[#allocation4 + $0x38] sm:$0xff]
        %v277 = vld [vmem:[#allocation4 + $0x40] sm:$0xff]
        %v278 = vld [vmem:[#allocation4 + $0x48] sm:$0xff]
        %v279 = vld [vmem:[#allocation4 + $0x50] sm:$0xff]
        %v280 = vld [vmem:[#allocation4 + $0x58] sm:$0xff]
        %v281 = vld [vmem:[#allocation4 + $0x60] sm:$0xff]
        %v282 = vld [vmem:[#allocation4 + $0x68] sm:$0xff]
        %v283 = vld [vmem:[#allocation4 + $0x70] sm:$0xff]
        %v284 = vld [vmem:[#allocation4 + $0x78] sm:$0xff]
        %285 = vmatpush.msra.mxu0 %v284
        %286 = vmatpush.msra.mxu0 %v283
        %287 = vmatpush.msra.mxu0 %v282
        %288 = vmatpush.msra.mxu0 %v281
        %289 = vmatpush.msra.mxu0 %v280
        %290 = vmatpush.msra.mxu0 %v279
        %291 = vmatpush.msra.mxu0 %v278
        %292 = vmatpush.msra.mxu0 %v277
        %293 = vmatpush.msra.mxu0 %v276
        %294 = vmatpush.msra.mxu0 %v275
        %295 = vmatpush.msra.mxu0 %v274
        %296 = vmatpush.msra.mxu0 %v273
        %297 = vmatpush.msra.mxu0 %v272
        %298 = vmatpush.msra.mxu0 %v271
        %299 = vmatpush.msra.mxu0 %v270
        %300 = vmatpush.msra.mxu0 %v269
        %301 = vmatmul.f32.gmra.mxu0 %v268
        %v302 = vpop.f32.mrf.mxu0
        %v303 = vadd.f32 0.0, %v302
        %304 = vdwg.mxu0
        %v305 = vadd.f32 %v268, %v303
        %306 = vst [vmem:[%s226] sm:$0xff] %v305
        %p307 = scmp.lt.s32.totalorder %s17, 1
        %s308 = scalar_select %p307, %s17, 1
        %s309 = smul.addr %s308, 8
        %s310 = scalar_lea.vmem %s4, %s309
        // Predicated region
        $region45: #{_embed_scores_impl.1} parent=35 // pred_check
          %p311 = pneg %p124
        $region46: #{_embed_scores_impl.1} parent=35 // pred_check_branch
          %313 = sbr.rel (%p311) target = $region48
        $region47: #{_embed_scores_impl.1} parent=35 // pred_region
          _
        $region48: #{_embed_scores_impl.1} parent=35 // pred_fallthru
          _
      $region36: #{_embed_scores_impl.1} parent=5 // pred_fallthru
        _
      %p314 = scmp.le.s32.totalorder 2, %s12
      // Predicated region
      $region49: #{_embed_scores_impl.1} parent=5 // pred_check
        %p315 = pneg %p314
      $region50: #{_embed_scores_impl.1} parent=5 // pred_check_branch
        %317 = sbr.rel (%p315) target = $region52
      $region51: #{_embed_scores_impl.1} parent=5 // pred_region
        %s318 = ssub.s32 %s12, 2
        // Predicated region
        $region53: #{_embed_scores_impl.1} parent=51 // pred_check
          %p319 = pneg %p130
        $region54: #{_embed_scores_impl.1} parent=51 // pred_check_branch
          %321 = sbr.rel (%p319) target = $region56
        $region55: #{_embed_scores_impl.1} parent=51 // pred_region
          %p322 = scmp.lt.s32.totalorder %s18, 1
          %s323 = scalar_select %p322, %s18, 1
          %s324 = smul.addr %s323, 8
          %s325 = scalar_lea.vmem %s4, %s324
        $region56: #{_embed_scores_impl.1} parent=51 // pred_fallthru
          _
      $region52: #{_embed_scores_impl.1} parent=5 // pred_fallthru
        _
    $region6: #{_embed_scores_impl.1} parent=1 // loop_footer
      %s16 = sadd.s32 1, %s12
    $region7: #{_embed_scores_impl.1} parent=1 // loop_footer_branch
      %11 = sbr.rel target = $region3
    $region8: #{_embed_scores_impl.1} parent=1 // loop_exit
      _
    %326 = vsyncpa [#allocation3], 1
    %s327 = scalar_lea.sflag [#allocation3], 1
    %328 = vsyncpa %s327, 1
    %329 = vsyncpa [#allocation5], 1

</llo_original>
